<compile_context>
chip_gen: v5e
topology: v5e:2x2
jax: 0.10.0
libtpu: 0.0.40
codegen_flags: <defaults>
</compile_context>

<pallas_src>
import jax
import jax.numpy as jnp
from jax.experimental import pallas as pl
from jax.experimental.pallas import tpu as pltpu


def _make_kernel(d_in: int, d_hid: int, d_out: int, tb: int, mask_padding: bool):
    """Kernel closure over static dims, batch tile size and padding flag."""
    n_chunks = tb // 128

    def kernel(x_ref, p_ref, tgt_ref, psum_ref):
        # --- resident packed parameters (one VMEM buffer, DMA'd once) -------
        w1t = p_ref[0:d_hid, 0:d_in]                        # (10, 10) = W1^T
        b1 = p_ref[0:d_hid, d_in:d_in + 1]                  # (10, 1)
        w2t = p_ref[d_hid:d_hid + d_out, 0:d_hid]           # (5, 10)  = W2^T
        b2 = p_ref[d_hid:d_hid + d_out, d_hid:d_hid + 1]    # (5, 1)

        # --- net1 + ReLU (batch on lanes) -----------------------------------
        x = x_ref[...]                                      # (10, tb)
        h = jnp.dot(w1t, x, preferred_element_type=jnp.float32) + b1
        h = jnp.maximum(h, 0.0)                             # (10, tb)

        # --- net2 ------------------------------------------------------------
        logits = jnp.dot(w2t, h, preferred_element_type=jnp.float32) + b2  # (5, tb)

        tgt = tgt_ref[...]                                  # (1, tb) int32

        # --- CrossEntropy, class axis unrolled (5 rows only; padded sublanes
        # of the (5, tb) tile never enter the reductions) ----------------------
        rows = [logits[c:c + 1, :] for c in range(d_out)]   # 5 x (1, tb)

        m = rows[0]
        for r in rows[1:]:
            m = jnp.maximum(m, r)                           # (1, tb)

        s = jnp.exp(rows[0] - m)
        for r in rows[1:]:
            s = s + jnp.exp(r - m)
        lse = jnp.log(s)                                    # (1, tb)

        tgt_logit = jnp.zeros_like(rows[0])
        for c, r in enumerate(rows):
            tgt_logit = jnp.where(tgt == c, r, tgt_logit)   # (1, tb)

        nll = (m + lse) - tgt_logit                         # (1, tb)

        if mask_padding:
            # Padded batch columns were given target = -1 in the wrapper.
            nll = jnp.where(tgt >= 0, nll, 0.0)

        # --- lane-partial sum: fold tb lanes to one (1, 128) row with pure
        # VPU adds over vreg-aligned static lane slices (no XLU reduce) -------
        acc = nll[:, 0:128]
        for c in range(1, n_chunks):
            acc = acc + nll[:, c * 128:(c + 1) * 128]
        psum_ref[...] = acc.reshape(psum_ref.shape)

    return kernel


def toy_model_loss(x, w1, b1, w2, b2, target, *, tb=None):
    """x: (B, 10) f32, target: (B,) int -> scalar f32 mean cross-entropy loss.

    Weights stored as (in_features, out_features): y = x @ W + b
    (transpose of PyTorch's nn.Linear weight layout; same math).
    """
    B, d_in = x.shape
    d_hid = w1.shape[1]
    d_out = w2.shape[1]

    if tb is None:
        b_ceil = pl.cdiv(B, 128) * 128
        # Single block for small/medium batches; otherwise keep >= 2 blocks so
        # v7x's second TensorCore gets work via the "parallel" batch axis.
        tb = b_ceil if b_ceil <= 8192 else 4096
    if tb % 128 != 0 or tb <= 0:
        raise ValueError("tb must be a positive multiple of 128")

    nb = pl.cdiv(B, tb)
    b_pad = nb * tb
    mask_padding = b_pad != B

    # Batch on the lane axis: x -> (d_in, b_pad), targets -> (1, b_pad).
    x_t = jnp.transpose(x)                                   # (d_in, B)
    tgt = target.astype(jnp.int32)
    if mask_padding:
        x_t = jnp.pad(x_t, ((0, 0), (0, b_pad - B)))
        tgt = jnp.pad(tgt, (0, b_pad - B), constant_values=-1)
    tgt2d = tgt.reshape(1, b_pad)

    # Pack all parameters into a single (16, 128) f32 block: one aligned DMA,
    # constant index_map -> resident in VMEM for the whole grid.
    params = jnp.zeros((16, 128), jnp.float32)
    params = params.at[0:d_hid, 0:d_in].set(w1.T)
    params = params.at[0:d_hid, d_in:d_in + 1].set(b1.reshape(d_hid, 1))
    params = params.at[d_hid:d_hid + d_out, 0:d_hid].set(w2.T)
    params = params.at[d_hid:d_hid + d_out, d_hid:d_hid + 1].set(
        b2.reshape(d_out, 1))

    psums = pl.pallas_call(
        _make_kernel(d_in, d_hid, d_out, tb, mask_padding),
        out_shape=jax.ShapeDtypeStruct((nb, 1, 128), jnp.float32),
        grid=(nb,),
        in_specs=[
            pl.BlockSpec((d_in, tb), lambda i: (0, i)),     # x tile (lanes = batch)
            pl.BlockSpec((16, 128), lambda i: (0, 0)),      # packed params (resident)
            pl.BlockSpec((1, tb), lambda i: (0, i)),        # target tile
        ],
        out_specs=pl.BlockSpec((1, 1, 128), lambda i: (i, 0, 0)),
        compiler_params=pltpu.CompilerParams(
            dimension_semantics=("parallel",)),
    )(x_t, params, tgt2d)

    # Cross-lane + cross-block reduction and the TRUE-batch mean, outside the
    # per-step critical path.
    return jnp.sum(psums) / jnp.float32(B)


def _reference_loss(x, w1, b1, w2, b2, target):
    h = jnp.maximum(x @ w1 + b1, 0.0)
    logits = h @ w2 + b2
    logp = jax.nn.log_softmax(logits, axis=-1)
    nll = -jnp.take_along_axis(logp, target[:, None].astype(jnp.int32), axis=-1)
    return jnp.mean(nll)


if __name__ == "__main__":
    key = jax.random.PRNGKey(0)
    k_x, k_w1, k_b1, k_w2, k_b2, k_t, k_x2, k_t2, k_x3, k_t3 = jax.random.split(key, 10)

    D_IN, D_HID, D_OUT = 10, 10, 5

    # Deterministic parameter init (uniform like PyTorch Linear default).
    bound1 = 1.0 / jnp.sqrt(D_IN)
    bound2 = 1.0 / jnp.sqrt(D_HID)
    w1 = jax.random.uniform(k_w1, (D_IN, D_HID), jnp.float32, -bound1, bound1)
    b1 = jax.random.uniform(k_b1, (D_HID,), jnp.float32, -bound1, bound1)
    w2 = jax.random.uniform(k_w2, (D_HID, D_OUT), jnp.float32, -bound2, bound2)
    b2 = jax.random.uniform(k_b2, (D_OUT,), jnp.float32, -bound2, bound2)

    # 1) Small batch: single padded block, default tile.
    B = 8
    x = jax.random.normal(k_x, (B, D_IN), jnp.float32)
    target = jax.random.randint(k_t, (B,), 0, D_OUT, jnp.int32)
    loss = jax.block_until_ready(toy_model_loss(x, w1, b1, w2, b2, target))
    ref = _reference_loss(x, w1, b1, w2, b2, target)
    assert jnp.allclose(loss, ref, atol=1e-5, rtol=1e-5), (loss, ref)

    # 2) Medium batch: single block (default tile rounds 300 -> 384), padded.
    B2 = 300
    x2 = jax.random.normal(k_x2, (B2, D_IN), jnp.float32)
    target2 = jax.random.randint(k_t2, (B2,), 0, D_OUT, jnp.int32)
    loss2 = jax.block_until_ready(toy_model_loss(x2, w1, b1, w2, b2, target2))
    ref2 = _reference_loss(x2, w1, b1, w2, b2, target2)
    assert jnp.allclose(loss2, ref2, atol=1e-5, rtol=1e-5), (loss2, ref2)

    # 3) Same batch forced to tb=128: multiple grid blocks + padded last block.
    loss3 = jax.block_until_ready(
        toy_model_loss(x2, w1, b1, w2, b2, target2, tb=128))
    assert jnp.allclose(loss3, ref2, atol=1e-5, rtol=1e-5), (loss3, ref2)

    # 4) Exactly divisible batch: multi-block, no-padding (mask elided) path.
    B3 = 256
    x3 = jax.random.normal(k_x3, (B3, D_IN), jnp.float32)
    target3 = jax.random.randint(k_t3, (B3,), 0, D_OUT, jnp.int32)
    loss4 = jax.block_until_ready(
        toy_model_loss(x3, w1, b1, w2, b2, target3, tb=128))
    ref4 = _reference_loss(x3, w1, b1, w2, b2, target3)
    assert jnp.allclose(loss4, ref4, atol=1e-5, rtol=1e-5), (loss4, ref4)

    print("KERNEL_OK")
</pallas_src>

<mosaic_0001>
module attributes {stable_mosaic.version = 11 : i64} {
  func.func @kernel(%arg0: i32, %arg1: memref<10x128xf32, #tpu.memory_space<vmem>>, %arg2: memref<16x128xf32, #tpu.memory_space<vmem>>, %arg3: memref<1x128xi32, #tpu.memory_space<vmem>>, %arg4: memref<1x1x128xf32, #tpu.memory_space<vmem>>) attributes {dimension_semantics = [#tpu.dimension_semantics<parallel>], iteration_bounds = array<i64: 1>, scalar_prefetch = 0 : i64, scratch_operands = 0 : i64, tpu.core_type = #tpu.core_type<tc>, window_params = [{transform_indices = @transform_0, window_bounds = array<i64: 10, 128>}, {pipeline_mode = #tpu.pipeline_mode<synchronous>, transform_indices = @transform_1, window_bounds = array<i64: 16, 128>}, {transform_indices = @transform_2, window_bounds = array<i64: 1, 128>}, {transform_indices = @transform_3, window_bounds = array<i64: 1, 1, 128>}]} {
    %c0 = arith.constant 0 : index
    %c0_0 = arith.constant 0 : index
    %0 = vector.load %arg2[%c0, %c0_0] : memref<16x128xf32, #tpu.memory_space<vmem>>, vector<10x10xf32>
    %c0_1 = arith.constant 0 : index
    %c10 = arith.constant 10 : index
    %1 = vector.load %arg2[%c0_1, %c10] : memref<16x128xf32, #tpu.memory_space<vmem>>, vector<10x1xf32>
    %c10_2 = arith.constant 10 : index
    %c0_3 = arith.constant 0 : index
    %2 = vector.load %arg2[%c10_2, %c0_3] : memref<16x128xf32, #tpu.memory_space<vmem>>, vector<5x10xf32>
    %c10_4 = arith.constant 10 : index
    %c10_5 = arith.constant 10 : index
    %3 = vector.load %arg2[%c10_4, %c10_5] : memref<16x128xf32, #tpu.memory_space<vmem>>, vector<5x1xf32>
    %c0_6 = arith.constant 0 : index
    %c0_7 = arith.constant 0 : index
    %4 = vector.load %arg1[%c0_6, %c0_7] : memref<10x128xf32, #tpu.memory_space<vmem>>, vector<10x128xf32>
    %cst = arith.constant dense<0.000000e+00> : vector<10x128xf32>
    %5 = tpu.matmul %0, %4, %cst {dimension_numbers = #tpu.dot_dimension_numbers<[1], [0], [0], [1], [0, 0, 1, 1], [], []>} : vector<10x10xf32>, vector<10x128xf32>, vector<10x128xf32> -> vector<10x128xf32>
    %6 = vector.broadcast %1 : vector<10x1xf32> to vector<10x128xf32>
    %7 = arith.addf %5, %6 : vector<10x128xf32>
    %cst_8 = arith.constant 0.000000e+00 : f32
    %8 = vector.broadcast %cst_8 : f32 to vector<10x128xf32>
    %9 = arith.maximumf %7, %8 : vector<10x128xf32>
    %cst_9 = arith.constant dense<0.000000e+00> : vector<5x128xf32>
    %10 = tpu.matmul %2, %9, %cst_9 {dimension_numbers = #tpu.dot_dimension_numbers<[1], [0], [0], [1], [0, 0, 1, 1], [], []>} : vector<5x10xf32>, vector<10x128xf32>, vector<5x128xf32> -> vector<5x128xf32>
    %11 = vector.broadcast %3 : vector<5x1xf32> to vector<5x128xf32>
    %12 = arith.addf %10, %11 : vector<5x128xf32>
    %c0_10 = arith.constant 0 : index
    %c0_11 = arith.constant 0 : index
    %13 = vector.load %arg3[%c0_10, %c0_11] : memref<1x128xi32, #tpu.memory_space<vmem>>, vector<1x128xi32>
    %14 = vector.extract_strided_slice %12 {offsets = [0, 0], sizes = [1, 128], strides = [1, 1]} : vector<5x128xf32> to vector<1x128xf32>
    %15 = vector.extract_strided_slice %12 {offsets = [1, 0], sizes = [1, 128], strides = [1, 1]} : vector<5x128xf32> to vector<1x128xf32>
    %16 = vector.extract_strided_slice %12 {offsets = [2, 0], sizes = [1, 128], strides = [1, 1]} : vector<5x128xf32> to vector<1x128xf32>
    %17 = vector.extract_strided_slice %12 {offsets = [3, 0], sizes = [1, 128], strides = [1, 1]} : vector<5x128xf32> to vector<1x128xf32>
    %18 = vector.extract_strided_slice %12 {offsets = [4, 0], sizes = [1, 128], strides = [1, 1]} : vector<5x128xf32> to vector<1x128xf32>
    %19 = arith.maximumf %14, %15 : vector<1x128xf32>
    %20 = arith.maximumf %19, %16 : vector<1x128xf32>
    %21 = arith.maximumf %20, %17 : vector<1x128xf32>
    %22 = arith.maximumf %21, %18 : vector<1x128xf32>
    %23 = arith.subf %14, %22 : vector<1x128xf32>
    %24 = math.exp %23 : vector<1x128xf32>
    %25 = arith.subf %15, %22 : vector<1x128xf32>
    %26 = math.exp %25 : vector<1x128xf32>
    %27 = arith.addf %24, %26 : vector<1x128xf32>
    %28 = arith.subf %16, %22 : vector<1x128xf32>
    %29 = math.exp %28 : vector<1x128xf32>
    %30 = arith.addf %27, %29 : vector<1x128xf32>
    %31 = arith.subf %17, %22 : vector<1x128xf32>
    %32 = math.exp %31 : vector<1x128xf32>
    %33 = arith.addf %30, %32 : vector<1x128xf32>
    %34 = arith.subf %18, %22 : vector<1x128xf32>
    %35 = math.exp %34 : vector<1x128xf32>
    %36 = arith.addf %33, %35 : vector<1x128xf32>
    %37 = math.log %36 : vector<1x128xf32>
    %cst_12 = arith.constant 0.000000e+00 : f32
    %38 = vector.broadcast %cst_12 : f32 to vector<1x128xf32>
    %c0_i32 = arith.constant 0 : i32
    %39 = vector.broadcast %c0_i32 : i32 to vector<1x128xi32>
    %40 = arith.cmpi eq, %13, %39 : vector<1x128xi32>
    %41 = arith.select %40, %14, %38 : vector<1x128xi1>, vector<1x128xf32>
    %c1_i32 = arith.constant 1 : i32
    %42 = vector.broadcast %c1_i32 : i32 to vector<1x128xi32>
    %43 = arith.cmpi eq, %13, %42 : vector<1x128xi32>
    %44 = arith.select %43, %15, %41 : vector<1x128xi1>, vector<1x128xf32>
    %c2_i32 = arith.constant 2 : i32
    %45 = vector.broadcast %c2_i32 : i32 to vector<1x128xi32>
    %46 = arith.cmpi eq, %13, %45 : vector<1x128xi32>
    %47 = arith.select %46, %16, %44 : vector<1x128xi1>, vector<1x128xf32>
    %c3_i32 = arith.constant 3 : i32
    %48 = vector.broadcast %c3_i32 : i32 to vector<1x128xi32>
    %49 = arith.cmpi eq, %13, %48 : vector<1x128xi32>
    %50 = arith.select %49, %17, %47 : vector<1x128xi1>, vector<1x128xf32>
    %c4_i32 = arith.constant 4 : i32
    %51 = vector.broadcast %c4_i32 : i32 to vector<1x128xi32>
    %52 = arith.cmpi eq, %13, %51 : vector<1x128xi32>
    %53 = arith.select %52, %18, %50 : vector<1x128xi1>, vector<1x128xf32>
    %54 = arith.addf %22, %37 : vector<1x128xf32>
    %55 = arith.subf %54, %53 : vector<1x128xf32>
    %c0_i32_13 = arith.constant 0 : i32
    %56 = vector.broadcast %c0_i32_13 : i32 to vector<1x128xi32>
    %57 = arith.cmpi sge, %13, %56 : vector<1x128xi32>
    %cst_14 = arith.constant 0.000000e+00 : f32
    %58 = vector.broadcast %cst_14 : f32 to vector<1x128xf32>
    %59 = arith.select %57, %55, %58 : vector<1x128xi1>, vector<1x128xf32>
    %60 = vector.shape_cast %59 : vector<1x128xf32> to vector<1x1x128xf32>
    %c0_15 = arith.constant 0 : index
    %c0_16 = arith.constant 0 : index
    %c0_17 = arith.constant 0 : index
    %61 = vector.load %arg4[%c0_15, %c0_16, %c0_17] : memref<1x1x128xf32, #tpu.memory_space<vmem>>, vector<1x1x128xf32>
    tpu.vector_store %arg4[%c0_15, %c0_16, %c0_17], %60 {strides = array<i32>} : memref<1x1x128xf32, #tpu.memory_space<vmem>>, vector<1x1x128xf32>,
    return
  }
  func.func @transform_0(%arg0: i32) -> (i32, i32) {
    %c0_i32 = arith.constant 0 : i32
    %c0_i32_0 = arith.constant 0 : i32
    return %c0_i32, %arg0 : i32, i32
  }
  func.func @transform_1(%arg0: i32) -> (i32, i32) {
    %c0_i32 = arith.constant 0 : i32
    %c0_i32_0 = arith.constant 0 : i32
    %c0_i32_1 = arith.constant 0 : i32
    return %c0_i32, %c0_i32_0 : i32, i32
  }
  func.func @transform_2(%arg0: i32) -> (i32, i32) {
    %c0_i32 = arith.constant 0 : i32
    %c0_i32_0 = arith.constant 0 : i32
    return %c0_i32, %arg0 : i32, i32
  }
  func.func @transform_3(%arg0: i32) -> (i32, i32, i32) {
    %c0_i32 = arith.constant 0 : i32
    %c0_i32_0 = arith.constant 0 : i32
    %c0_i32_1 = arith.constant 0 : i32
    return %arg0, %c0_i32, %c0_i32_0 : i32, i32, i32
  }
}

</mosaic_0001>

<llo_original>
// kernel: tpu_custom_call.1
$region0: #{tpu_custom_call.1}
  #allocation0 [shape = 'u32[]', space=smem, size = 0x4, offset = 0x4, fixed_abs, tag = 'smem constant byte address 0x4 - core index']
  #allocation1 [shape = 'u32[72,128]{1,0:T(1,128)}', space=vmem, size = 0x9000, scoped, tag = 'internal scratch']
  %s0 = inlined_call_operand.hbm [shape: f32[10,128], index: 0, kind: input, shape index: {}]
  %s1 = inlined_call_operand.hbm [shape: f32[16,128], index: 1, kind: input, shape index: {}]
  %s2 = inlined_call_operand.vmem [shape: s32[1,128], index: 2, kind: input, shape index: {}]
  %s3 = inlined_call_operand.hbm [shape: f32[1,1,128], index: 3, kind: output, shape index: {}]
  %s4 = sld [smem:[#allocation0]]
  $region30: #{tpu_custom_call.1} parent=0
    _
  %s6 = ssub.s32 1, %s4
  %s7 = scalar_select 0, %s6, %s4
  $region1: #{tpu_custom_call.1} parent=0
    #allocation2 [shape = 'u8[8192]{0}', space=vmem, size = 0x2000, scoped, tag = 'input window, operand 0, single buffered']
    #allocation3 [shape = 's32[1]{0}', space=sflag, size = 0x4, scoped, tag = 'scoped memory for tpu_custom_call.1']
    #allocation4 [shape = 's32[1]{0}', space=sflag, size = 0x4, scoped, tag = 'scoped memory for tpu_custom_call.1']
    #allocation5 [shape = 'u8[8192]{0}', space=vmem, size = 0x2000, scoped, tag = 'input window, operand 1, single buffered']
    #allocation6 [shape = 's32[1]{0}', space=sflag, size = 0x4, scoped, tag = 'scoped memory for tpu_custom_call.1']
    #allocation7 [shape = 'u8[512]{0}', space=vmem, size = 0x400, scoped, tag = 'output window, operand 0, single buffered']
    %8 = vsyncpa [#allocation3], 0
    %9 = vsyncpa [#allocation6], 0
    %10 = vsyncpa [#allocation4], 0
    // Predicated region
    $region2: #{tpu_custom_call.1} parent=1 // pred_check
      _
    $region3: #{tpu_custom_call.1} parent=1 // pred_check_branch
      %12 = sbr.rel (0) target = $region5
    $region4: #{tpu_custom_call.1} parent=1 // pred_region
      %14 = vsyncadd [#allocation3], 0
      %s15 = sshll.u32 %s0, 4
      %s16 = int_to_ptr.hbm [resolvable:$true] %s15
      %s17 = sshll.u32 [#allocation2], 4
      %s18 = int_to_ptr.vmem [resolvable:$true] %s17
      %23 = dma.hbm_to_vmem [thread:$0]  %s16, 256, %s18, [#allocation3], 128, 128, 8
    $region5: #{tpu_custom_call.1} parent=1 // pred_fallthru
      _
    // Predicated region
    $region6: #{tpu_custom_call.1} parent=1 // pred_check
      _
    $region7: #{tpu_custom_call.1} parent=1 // pred_check_branch
      %25 = sbr.rel (0) target = $region9
    $region8: #{tpu_custom_call.1} parent=1 // pred_region
      %27 = vsyncadd [#allocation6], 0
      %s28 = sshll.u32 %s1, 4
      %s29 = int_to_ptr.hbm [resolvable:$true] %s28
      %s30 = sshll.u32 [#allocation5], 4
      %s31 = int_to_ptr.vmem [resolvable:$true] %s30
      %36 = dma.hbm_to_vmem [thread:$0]  %s29, 256, %s31, [#allocation6], 128, 128, 8
    $region9: #{tpu_custom_call.1} parent=1 // pred_fallthru
      _
    // Predicated region
    $region10: #{tpu_custom_call.1} parent=1 // pred_check
      _
    $region11: #{tpu_custom_call.1} parent=1 // pred_check_branch
      %38 = sbr.rel (0) target = $region13
    $region12: #{tpu_custom_call.1} parent=1 // pred_region
      _
    $region13: #{tpu_custom_call.1} parent=1 // pred_fallthru
      _
    // Predicated region
    $region14: #{tpu_custom_call.1} parent=1 // pred_check
      _
    $region15: #{tpu_custom_call.1} parent=1 // pred_check_branch
      %40 = sbr.rel (0) target = $region17
    $region16: #{tpu_custom_call.1} parent=1 // pred_region
      %42 = dma.done [#allocation3], 256
    $region17: #{tpu_custom_call.1} parent=1 // pred_fallthru
      _
    // Predicated region
    $region18: #{tpu_custom_call.1} parent=1 // pred_check
      _
    $region19: #{tpu_custom_call.1} parent=1 // pred_check_branch
      %44 = sbr.rel (0) target = $region21
    $region20: #{tpu_custom_call.1} parent=1 // pred_region
      %46 = dma.done [#allocation6], 256
    $region21: #{tpu_custom_call.1} parent=1 // pred_fallthru
      _
    %v47 = vld [vmem:[#allocation5] sm:$0xff]
    %v48 = vld [vmem:[#allocation5 + $0x8] sm:$0x3]
    %v49 = vld [vmem:[#allocation5 + $0xa] sm:$0x1f]
    %v50 = vld [vmem:[#allocation2] sm:$0xff]
    %v51 = vld [vmem:[#allocation2 + $0x8] sm:$0x3]
    %53 = vset.pattern.permute.xlu0 10
    %54 = vperm.xlu0 %53, %v47
    %v55 = vpop.permute.xlu0 %54
    %58 = vset.pattern.permute.xlu0 10
    %59 = vperm.xlu0 %58, %v48
    %v60 = vpop.permute.xlu0 %59
    %vm62 = vcmask 80896
    %v63 = vsel %vm62, %v47, 0
    %v65 = vsel %vm62, %v48, 0
    %vm67 = vcmask 1041408
    %v69 = vsel %vm67, %v51, 0
    %71 = vmatpush.msra.mxu0 0.0
    %72 = vmatpush.msra.mxu0 0.0
    %73 = vmatpush.msra.mxu0 0.0
    %74 = vmatpush.msra.mxu0 0.0
    %75 = vmatpush.msra.mxu0 0.0
    %76 = vmatpush.msra.mxu0 0.0
    %77 = vmatpush.msra.mxu0 0.0
    %78 = vmatpush.msra.mxu0 0.0
    %79 = vmatpush.msra.mxu0 0.0
    %80 = vmatpush.msra.mxu0 0.0
    %81 = vmatpush.msra.mxu0 0.0
    %82 = vmatpush.msra.mxu0 0.0
    %83 = vmatpush.msra.mxu0 0.0
    %84 = vmatpush.msra.mxu0 0.0
    %85 = vmatpush.msra.mxu0 %v69
    %86 = vmatpush.msra.mxu0 %v50
    %87 = vmatmul.f32.gmra.mxu0 %v63
    %v88 = vpop.f32.mrf.mxu0
    %v89 = vadd.f32 %v55, %v88
    %90 = vmatmul.f32.gmra.mxu0 %v65
    %v91 = vpop.f32.mrf.mxu0
    %v92 = vadd.f32 %v60, %v91
    %93 = vdwg.mxu0
    %v94 = vmax.f32 %v89, 0.0
    %v95 = vmax.f32 %v92, 0.0
    %97 = vset.pattern.permute.xlu0 10
    %98 = vperm.xlu0 %97, %v49
    %v99 = vpop.permute.xlu0 %98
    %v101 = vsel %vm62, %v49, 0
    %v104 = vsel %vm67, %v95, 0
    %106 = vmatpush.msra.mxu0 0.0
    %107 = vmatpush.msra.mxu0 0.0
    %108 = vmatpush.msra.mxu0 0.0
    %109 = vmatpush.msra.mxu0 0.0
    %110 = vmatpush.msra.mxu0 0.0
    %111 = vmatpush.msra.mxu0 0.0
    %112 = vmatpush.msra.mxu0 0.0
    %113 = vmatpush.msra.mxu0 0.0
    %114 = vmatpush.msra.mxu0 0.0
    %115 = vmatpush.msra.mxu0 0.0
    %116 = vmatpush.msra.mxu0 0.0
    %117 = vmatpush.msra.mxu0 0.0
    %118 = vmatpush.msra.mxu0 0.0
    %119 = vmatpush.msra.mxu0 0.0
    %120 = vmatpush.msra.mxu0 %v104
    %121 = vmatpush.msra.mxu0 %v94
    %122 = vmatmul.f32.gmra.mxu0 %v101
    %v123 = vpop.f32.mrf.mxu0
    %v124 = vadd.f32 %v99, %v123
    %125 = vdwg.mxu0
    %v126 = vld [vmem:[%s2] sm:$0x1]
    %v128 = vrot.slane %v124, 1
    %v130 = vmax.f32 %v124, %v128
    %v131 = vrot.slane %v124, 2
    %v133 = vmax.f32 %v130, %v131
    %v134 = vrot.slane %v124, 3
    %v136 = vmax.f32 %v133, %v134
    %v137 = vrot.slane %v124, 4
    %v139 = vmax.f32 %v136, %v137
    %v140 = vsub.f32 %v124, %v139
    %v141 = vmul.f32 %v140, 1.442695
    %v142 = vpow.pop %v141
    %v144 = vrot.slane %v139, 7
    %v146 = vsub.f32 %v124, %v144
    %v147 = vmul.f32 %v146, 1.442695
    %v148 = vpow.pop %v147
    %v150 = vrot.slane %v148, 1
    %v152 = vadd.f32 %v142, %v150
    %v153 = vrot.slane %v139, 6
    %v155 = vsub.f32 %v124, %v153
    %v156 = vmul.f32 %v155, 1.442695
    %v157 = vpow.pop %v156
    %v159 = vrot.slane %v157, 2
    %v161 = vadd.f32 %v152, %v159
    %v162 = vrot.slane %v139, 5
    %v164 = vsub.f32 %v124, %v162
    %v165 = vmul.f32 %v164, 1.442695
    %v166 = vpow.pop %v165
    %v168 = vrot.slane %v166, 3
    %v170 = vadd.f32 %v161, %v168
    %v171 = vrot.slane %v139, 4
    %v173 = vsub.f32 %v124, %v171
    %v174 = vmul.f32 %v173, 1.442695
    %v175 = vpow.pop %v174
    %v177 = vrot.slane %v175, 4
    %v179 = vadd.f32 %v170, %v177
    %v180 = vlog2.pop %v179
    %v181 = vmul.f32 %v180, 0.6931472
    %vm182 = vcmp.eq.s32.totalorder %v126, 0
    %v183 = vsel %vm182, %v124, 0.0
    %vm184 = vcmp.eq.s32.totalorder %v126, 1
    %185 = vst [vmem:[#allocation1] sm:$0xff] %v124
    %s186 = scalar_lea.vmem [#allocation1], 1
    %v187 = vld [vmem:[%s186] ss:$9 sm:$0xff]
    %v189 = vsel %vm184, %v187, %v183
    %vm190 = vcmp.eq.s32.totalorder %v126, 2
    %191 = vst [vmem:[#allocation1] sm:$0xff] %v124
    %s192 = scalar_lea.vmem [#allocation1], 2
    %v193 = vld [vmem:[%s192] ss:$9 sm:$0xff]
    %v195 = vsel %vm190, %v193, %v189
    %vm196 = vcmp.eq.s32.totalorder %v126, 3
    %197 = vst [vmem:[#allocation1] sm:$0xff] %v124
    %s198 = scalar_lea.vmem [#allocation1], 3
    %v199 = vld [vmem:[%s198] ss:$9 sm:$0xff]
    %v201 = vsel %vm196, %v199, %v195
    %vm202 = vcmp.eq.s32.totalorder %v126, 4
    %203 = vst [vmem:[#allocation1] sm:$0xff] %v124
    %s204 = scalar_lea.vmem [#allocation1], 4
    %v205 = vld [vmem:[%s204] ss:$9 sm:$0xff]
    %v207 = vsel %vm202, %v205, %v201
    %v208 = vadd.f32 %v139, %v181
    %v209 = vsub.f32 %v208, %v207
    %vm210 = vcmp.ge.s32.totalorder %v126, 0
    %v211 = vsel %vm210, %v209, 0.0
    %212 = vst [vmem:[#allocation7] sm:$0x1] %v211
    // Predicated region
    $region22: #{tpu_custom_call.1} parent=1 // pred_check
      _
    $region23: #{tpu_custom_call.1} parent=1 // pred_check_branch
      %214 = sbr.rel (0) target = $region25
    $region24: #{tpu_custom_call.1} parent=1 // pred_region
      %216 = vsyncadd [#allocation4], 0
      %s218 = sshll.u32 [#allocation7], 4
      %s219 = int_to_ptr.vmem [resolvable:$true] %s218
      %s220 = sshll.u32 %s3, 4
      %s221 = int_to_ptr.hbm [resolvable:$true] %s220
      %223 = dma.vmem_to_hbm [thread:$0]  %s219, 16, %s221, [#allocation4]
    $region25: #{tpu_custom_call.1} parent=1 // pred_fallthru
      _
    // Predicated region
    $region26: #{tpu_custom_call.1} parent=1 // pred_check
      _
    $region27: #{tpu_custom_call.1} parent=1 // pred_check_branch
      %225 = sbr.rel (0) target = $region29
    $region28: #{tpu_custom_call.1} parent=1 // pred_region
      %227 = dma.done [#allocation4], 16
    $region29: #{tpu_custom_call.1} parent=1 // pred_fallthru
      _
    %228 = vsyncpa [#allocation3], 1
    %229 = vsyncpa [#allocation6], 1
    %230 = vsyncpa [#allocation4], 1

</llo_original>
